<compile_context>
chip_gen: v7x
topology: tpu7x:2x2x1
jax: 0.10.0
libtpu: 0.0.40
codegen_flags: <defaults>
</compile_context>

<pallas_src>
import numpy as np
import jax
import jax.numpy as jnp
from jax.experimental import pallas as pl
from jax.experimental.pallas import tpu as pltpu

# ---- static geometry implied by the module (Linear(16*11, 64) forces L_in=16)
B = 2                               # batch
L_IN = 16                           # input length
C1, K1, P1 = 4, 3, 2                # Conv1d(1 -> 4, k=3, pad=2)
L1 = L_IN + 2 * P1 - K1 + 1         # 18
C2, K2, P2 = 16, 2, 2               # Conv1d(4 -> 16, k=2, pad=2)
L2 = L1 + 2 * P2 - K2 + 1           # 21
L_POOL = (L2 + 2 * 1 - 2) // 2 + 1  # MaxPool1d(k=2, s=2, pad=1) -> 11
FLAT = C2 * L_POOL                  # 176
H1, H2, H3 = 64, 16, 1
EPS = 1e-5

# ---- kernel lane/sublane layout constants ------------------------------------
S1 = L1                 # 18  : conv1 per-channel lane segment (y1[c,l] at lane c*S1+l)
N1 = C1 * S1            # 72  : conv1 output width
S2 = 16                 # pooled per-channel segment width (>= L_POOL = 11)
REG = C2 * S2           # 256 : one MaxPool operand region (128-aligned)
N2 = 2 * REG            # 512 : conv2 output width = [region A | region B]
W_ROWS = 96             # slabW rows: [0:72) W2toe, [72:88) W1toe, [88:96) bias/vec block
F_ROWS = REG + H1       # 320 : slabF rows: [0:256) Wfc1z, [256:320) wfc2


# ------------------------------- kernel ----------------------------------------
def conv1dnet_kernel(x_ref,       # VMEM (B, 16)        raw input rows
                     wslab_ref,   # VMEM (96, 512)      conv Toeplitz weights + all bias rows
                     fslab_ref,   # VMEM (320, 64)      FC1 (pool/flatten-folded) + FC2 weights
                     out_ref):    # VMEM (B, 1)
    f32 = jnp.float32

    # Bias / small-vector block: one aligned (8, 512) load, sliced in-register.
    vec = wslab_ref[88:96, :]
    b1  = vec[0:1, 0:N1]            # conv1 + BN1 shift     (1, 72)
    b2  = vec[1:2, :]               # conv2 + BN2 shift     (1, 512)  (masked lanes = 0)
    bf1 = vec[2:3, 0:H1]            # fc1 bias              (1, 64)
    bf2 = vec[3:4, 0:H2]            # fc2 bias              (1, 16)
    w3  = vec[4:5, 0:H2]            # fc3 weight row        (1, 16)
    bf3 = vec[5:6, 0:1]             # fc3 bias              (1, 1)

    x = x_ref[...]                                                     # (B, 16)

    # Conv1d(1->4, k=3, pad=2) + BatchNorm1d(4) + ReLU : one Toeplitz matmul
    # (conv zero-padding lives in the zero rows of the Toeplitz weight).
    y1 = jnp.maximum(
        jnp.dot(x, wslab_ref[N1:N1 + L_IN, 0:N1],
                preferred_element_type=f32) + b1, 0.0)                 # (B, 72)
    # TODO(synk): training-mode Dropout(p=0.3) / batch-statistics BatchNorm not
    # implemented (inference: dropout = identity, BN folded with running stats).

    # Conv1d(4->16, k=2, pad=2) + BatchNorm1d(16) + ReLU : one Toeplitz matmul.
    # Output columns are pre-arranged as [pool-member A | pool-member B].
    y2 = jnp.maximum(
        jnp.dot(y1, wslab_ref[0:N1, :],
                preferred_element_type=f32) + b2, 0.0)                 # (B, 512)

    # MaxPool1d(k=2, s=2, pad=1): elementwise max of two 128-aligned regions.
    # Pool pad uses 0 instead of -inf — valid only because y2 is post-ReLU >= 0.
    m = jnp.maximum(y2[:, 0:REG], y2[:, REG:N2])                       # (B, 256)

    # Flatten (channel-major) + Linear(176, 64) + ReLU : stride-2 selection and
    # Flatten are folded into the zero-padded FC1 weight -> one matmul that
    # contracts channels and positions together on the MXU.
    h = jnp.maximum(
        jnp.dot(m, fslab_ref[0:REG, :],
                preferred_element_type=f32) + bf1, 0.0)                # (B, 64)

    # Dropout(identity) + Linear(64, 16) + ReLU
    h = jnp.maximum(
        jnp.dot(h, fslab_ref[REG:REG + H1, 0:H2],
                preferred_element_type=f32) + bf2, 0.0)                # (B, 16)

    # Linear(16, 1) on the VPU/XLU (cheaper than an MXU round trip at (2,16)).
    out_ref[...] = jnp.sum(h * w3, axis=-1, keepdims=True) + bf3       # (B, 1)


# ------------------------------ wrapper -----------------------------------------
def conv1dnet_forward(x, kp):
    """x: (B, 1, L_IN) float32 (NCL, like PyTorch).  Returns (B, 1)."""
    x2 = x[:, 0, :].astype(jnp.float32)                                # (B, 16)
    vmem = lambda: pl.BlockSpec(memory_space=pltpu.MemorySpace.VMEM)
    return pl.pallas_call(
        conv1dnet_kernel,
        out_shape=jax.ShapeDtypeStruct((x.shape[0], H3), jnp.float32),
        in_specs=[vmem(), vmem(), vmem()],
        out_specs=vmem(),
    )(x2, kp["slabW"], kp["slabF"])


# ----------------------------- parameters ---------------------------------------
def make_params(key):
    ks = list(jax.random.split(key, 18))
    f32 = jnp.float32
    P = {}
    P["w1"] = 0.4 * jax.random.normal(ks[0], (C1, 1, K1), f32)
    P["b1"] = 0.1 * jax.random.normal(ks[1], (C1,), f32)
    P["g1"] = 1.0 + 0.1 * jax.random.normal(ks[2], (C1,), f32)
    P["beta1"] = 0.1 * jax.random.normal(ks[3], (C1,), f32)
    P["m1"] = 0.05 * jax.random.normal(ks[4], (C1,), f32)
    P["v1"] = jax.random.uniform(ks[5], (C1,), f32, 0.5, 1.5)

    P["w2"] = 0.3 * jax.random.normal(ks[6], (C2, C1, K2), f32)
    P["b2"] = 0.1 * jax.random.normal(ks[7], (C2,), f32)
    P["g2"] = 1.0 + 0.1 * jax.random.normal(ks[8], (C2,), f32)
    P["beta2"] = 0.1 * jax.random.normal(ks[9], (C2,), f32)
    P["m2"] = 0.05 * jax.random.normal(ks[10], (C2,), f32)
    P["v2"] = jax.random.uniform(ks[11], (C2,), f32, 0.5, 1.5)

    P["wfc1"] = jax.random.normal(ks[12], (FLAT, H1), f32) / jnp.sqrt(FLAT)
    P["bfc1"] = 0.1 * jax.random.normal(ks[13], (H1,), f32)
    P["wfc2"] = jax.random.normal(ks[14], (H1, H2), f32) / jnp.sqrt(H1)
    P["bfc2"] = 0.1 * jax.random.normal(ks[15], (H2,), f32)
    P["wfc3"] = jax.random.normal(ks[16], (H2, H3), f32) / jnp.sqrt(H2)
    P["bfc3"] = 0.1 * jax.random.normal(ks[17], (H3,), f32)
    return P


def pack_kernel_params(P):
    """Host-side packing: fold conv bias + eval-mode BN into Toeplitz conv weights
    and lane-masked bias rows; arrange conv2 output columns so MaxPool is one
    aligned max; fold the pool stride-2 selection and channel-major Flatten into
    the FC1 weight; pack everything into two tile-aligned slabs (3 DMAs total)."""
    f32 = np.float32
    w1 = np.asarray(P["w1"], f32)                      # (4, 1, 3)
    w2 = np.asarray(P["w2"], f32)                      # (16, 4, 2)
    s1 = np.asarray(P["g1"], f32) / np.sqrt(np.asarray(P["v1"], f32) + EPS)
    t1 = np.asarray(P["beta1"], f32) + s1 * (np.asarray(P["b1"], f32) - np.asarray(P["m1"], f32))
    s2 = np.asarray(P["g2"], f32) / np.sqrt(np.asarray(P["v2"], f32) + EPS)
    t2 = np.asarray(P["beta2"], f32) + s2 * (np.asarray(P["b2"], f32) - np.asarray(P["m2"], f32))

    # Conv1 Toeplitz (BN1 scale folded): y1row[b, c*S1+l] = sum_j x[b,j]*W1toe[j, c*S1+l]
    W1toe = np.zeros((L_IN, N1), f32)
    for c in range(C1):
        for l in range(L1):
            for k in range(K1):
                j = l + k - P1
                if 0 <= j < L_IN:
                    W1toe[j, c * S1 + l] = s1[c] * w1[c, 0, k]
    b1row = np.zeros((N1,), f32)
    for c in range(C1):
        b1row[c * S1:(c + 1) * S1] = t1[c]

    # Conv2 Toeplitz (BN2 scale folded).  Column placement: MaxPool window t of
    # channel o has members y2[o, 2t-1] (A, t>=1; t=0 slot is the zero pool pad)
    # and y2[o, 2t] (B); A lives at lane o*S2+t, B at lane REG + o*S2+t.
    def col2(o, l2):
        if l2 % 2 == 1:
            return o * S2 + (l2 + 1) // 2           # region A
        return REG + o * S2 + l2 // 2               # region B

    W2toe = np.zeros((N1, N2), f32)
    b2row = np.zeros((N2,), f32)
    for o in range(C2):
        for l2 in range(L2):
            cc = col2(o, l2)
            b2row[cc] = t2[o]
            for c in range(C1):
                for k in range(K2):
                    l1 = l2 + k - P2
                    if 0 <= l1 < L1:
                        W2toe[c * S1 + l1, cc] += s2[o] * w2[o, c, k]

    # FC1 weight in the pooled layout (channel-major torch Flatten folded in).
    wfc1 = np.asarray(P["wfc1"], f32)                  # (176, 64)
    Wfc1z = np.zeros((REG, H1), f32)
    for o in range(C2):
        Wfc1z[o * S2: o * S2 + L_POOL, :] = wfc1[o * L_POOL:(o + 1) * L_POOL, :]

    # Slab A: conv weights + all bias/vector rows (rows 88..95 form one aligned tile row).
    slabW = np.zeros((W_ROWS, N2), f32)
    slabW[0:N1, :] = W2toe
    slabW[N1:N1 + L_IN, 0:N1] = W1toe
    slabW[88, 0:N1] = b1row
    slabW[89, :] = b2row
    slabW[90, 0:H1] = np.asarray(P["bfc1"], f32)
    slabW[91, 0:H2] = np.asarray(P["bfc2"], f32)
    slabW[92, 0:H2] = np.asarray(P["wfc3"], f32)[:, 0]
    slabW[93, 0] = np.asarray(P["bfc3"], f32)[0]

    # Slab B: FC1 (pool/flatten-folded) + FC2 weights.
    slabF = np.zeros((F_ROWS, H1), f32)
    slabF[0:REG, :] = Wfc1z
    slabF[REG:REG + H1, 0:H2] = np.asarray(P["wfc2"], f32)

    return {"slabW": jnp.asarray(slabW), "slabF": jnp.asarray(slabF)}


# --------------------------- pure-JAX reference ----------------------------------
def reference_forward(x, P):
    def bn(y, g, b, m, v):
        return (g[None, :, None] * (y - m[None, :, None])
                / jnp.sqrt(v[None, :, None] + EPS) + b[None, :, None])

    dn = ("NCH", "OIH", "NCH")
    y = jax.lax.conv_general_dilated(x, P["w1"], (1,), ((P1, P1),),
                                     dimension_numbers=dn) + P["b1"][None, :, None]
    y = jax.nn.relu(bn(y, P["g1"], P["beta1"], P["m1"], P["v1"]))
    y = jax.lax.conv_general_dilated(y, P["w2"], (1,), ((P2, P2),),
                                     dimension_numbers=dn) + P["b2"][None, :, None]
    y = jax.nn.relu(bn(y, P["g2"], P["beta2"], P["m2"], P["v2"]))
    yp = jnp.pad(y, ((0, 0), (0, 0), (1, 1)), constant_values=-jnp.inf)   # (B,16,23)
    pooled = jnp.maximum(yp[:, :, 0:2 * L_POOL:2], yp[:, :, 1:2 * L_POOL + 1:2])
    flat = pooled.reshape(x.shape[0], -1)                                  # (B,176)
    h = jax.nn.relu(flat @ P["wfc1"] + P["bfc1"])
    h = jax.nn.relu(h @ P["wfc2"] + P["bfc2"])
    return h @ P["wfc3"] + P["bfc3"]


if __name__ == "__main__":
    key = jax.random.PRNGKey(0)
    kx, kparam = jax.random.split(key)
    x = jax.random.normal(kx, (B, 1, L_IN), jnp.float32)   # NCL, like PyTorch

    P = make_params(kparam)
    kernel_params = pack_kernel_params(P)

    out = conv1dnet_forward(x, kernel_params)
    out = jax.block_until_ready(out)
    assert out.shape == (B, 1), out.shape

    ref = reference_forward(x, P)
    if not bool(jnp.allclose(out, ref, rtol=1e-3, atol=1e-3)):
        raise AssertionError(f"Pallas kernel mismatch:\n{out}\nvs ref\n{ref}")

    print("KERNEL_OK")
</pallas_src>

<mosaic_0001>
module attributes {stable_mosaic.version = 11 : i64} {
  func.func @conv1dnet_kernel(%arg0: memref<2x16xf32, #tpu.memory_space<vmem>>, %arg1: memref<96x512xf32, #tpu.memory_space<vmem>>, %arg2: memref<320x64xf32, #tpu.memory_space<vmem>>, %arg3: memref<2x1xf32, #tpu.memory_space<vmem>>) attributes {dimension_semantics = [], scalar_prefetch = 0 : i64, scratch_operands = 0 : i64, tpu.core_type = #tpu.core_type<tc>} {
    %c88 = arith.constant 88 : index
    %c0 = arith.constant 0 : index
    %0 = vector.load %arg1[%c88, %c0] : memref<96x512xf32, #tpu.memory_space<vmem>>, vector<8x512xf32>
    %1 = vector.extract_strided_slice %0 {offsets = [0, 0], sizes = [1, 72], strides = [1, 1]} : vector<8x512xf32> to vector<1x72xf32>
    %2 = vector.extract_strided_slice %0 {offsets = [1, 0], sizes = [1, 512], strides = [1, 1]} : vector<8x512xf32> to vector<1x512xf32>
    %3 = vector.extract_strided_slice %0 {offsets = [2, 0], sizes = [1, 64], strides = [1, 1]} : vector<8x512xf32> to vector<1x64xf32>
    %4 = vector.extract_strided_slice %0 {offsets = [3, 0], sizes = [1, 16], strides = [1, 1]} : vector<8x512xf32> to vector<1x16xf32>
    %5 = vector.extract_strided_slice %0 {offsets = [4, 0], sizes = [1, 16], strides = [1, 1]} : vector<8x512xf32> to vector<1x16xf32>
    %6 = vector.extract_strided_slice %0 {offsets = [5, 0], sizes = [1, 1], strides = [1, 1]} : vector<8x512xf32> to vector<1x1xf32>
    %c0_0 = arith.constant 0 : index
    %c0_1 = arith.constant 0 : index
    %7 = vector.load %arg0[%c0_0, %c0_1] : memref<2x16xf32, #tpu.memory_space<vmem>>, vector<2x16xf32>
    %c72 = arith.constant 72 : index
    %c0_2 = arith.constant 0 : index
    %8 = vector.load %arg1[%c72, %c0_2] : memref<96x512xf32, #tpu.memory_space<vmem>>, vector<16x72xf32>
    %cst = arith.constant dense<0.000000e+00> : vector<2x72xf32>
    %9 = tpu.matmul %7, %8, %cst {dimension_numbers = #tpu.dot_dimension_numbers<[1], [0], [0], [1], [0, 0, 1, 1], [], []>} : vector<2x16xf32>, vector<16x72xf32>, vector<2x72xf32> -> vector<2x72xf32>
    %10 = vector.broadcast %1 : vector<1x72xf32> to vector<2x72xf32>
    %11 = arith.addf %9, %10 : vector<2x72xf32>
    %cst_3 = arith.constant 0.000000e+00 : f32
    %12 = vector.broadcast %cst_3 : f32 to vector<2x72xf32>
    %13 = arith.maximumf %11, %12 : vector<2x72xf32>
    %c0_4 = arith.constant 0 : index
    %c0_5 = arith.constant 0 : index
    %14 = vector.load %arg1[%c0_4, %c0_5] : memref<96x512xf32, #tpu.memory_space<vmem>>, vector<72x512xf32>
    %cst_6 = arith.constant dense<0.000000e+00> : vector<2x512xf32>
    %15 = tpu.matmul %13, %14, %cst_6 {dimension_numbers = #tpu.dot_dimension_numbers<[1], [0], [0], [1], [0, 0, 1, 1], [], []>} : vector<2x72xf32>, vector<72x512xf32>, vector<2x512xf32> -> vector<2x512xf32>
    %16 = vector.broadcast %2 : vector<1x512xf32> to vector<2x512xf32>
    %17 = arith.addf %15, %16 : vector<2x512xf32>
    %cst_7 = arith.constant 0.000000e+00 : f32
    %18 = vector.broadcast %cst_7 : f32 to vector<2x512xf32>
    %19 = arith.maximumf %17, %18 : vector<2x512xf32>
    %20 = vector.extract_strided_slice %19 {offsets = [0, 0], sizes = [2, 256], strides = [1, 1]} : vector<2x512xf32> to vector<2x256xf32>
    %21 = vector.extract_strided_slice %19 {offsets = [0, 256], sizes = [2, 256], strides = [1, 1]} : vector<2x512xf32> to vector<2x256xf32>
    %22 = arith.maximumf %20, %21 : vector<2x256xf32>
    %c0_8 = arith.constant 0 : index
    %c0_9 = arith.constant 0 : index
    %23 = vector.load %arg2[%c0_8, %c0_9] : memref<320x64xf32, #tpu.memory_space<vmem>>, vector<256x64xf32>
    %cst_10 = arith.constant dense<0.000000e+00> : vector<2x64xf32>
    %24 = tpu.matmul %22, %23, %cst_10 {dimension_numbers = #tpu.dot_dimension_numbers<[1], [0], [0], [1], [0, 0, 1, 1], [], []>} : vector<2x256xf32>, vector<256x64xf32>, vector<2x64xf32> -> vector<2x64xf32>
    %25 = vector.broadcast %3 : vector<1x64xf32> to vector<2x64xf32>
    %26 = arith.addf %24, %25 : vector<2x64xf32>
    %cst_11 = arith.constant 0.000000e+00 : f32
    %27 = vector.broadcast %cst_11 : f32 to vector<2x64xf32>
    %28 = arith.maximumf %26, %27 : vector<2x64xf32>
    %c256 = arith.constant 256 : index
    %c0_12 = arith.constant 0 : index
    %29 = vector.load %arg2[%c256, %c0_12] : memref<320x64xf32, #tpu.memory_space<vmem>>, vector<64x16xf32>
    %cst_13 = arith.constant dense<0.000000e+00> : vector<2x16xf32>
    %30 = tpu.matmul %28, %29, %cst_13 {dimension_numbers = #tpu.dot_dimension_numbers<[1], [0], [0], [1], [0, 0, 1, 1], [], []>} : vector<2x64xf32>, vector<64x16xf32>, vector<2x16xf32> -> vector<2x16xf32>
    %31 = vector.broadcast %4 : vector<1x16xf32> to vector<2x16xf32>
    %32 = arith.addf %30, %31 : vector<2x16xf32>
    %cst_14 = arith.constant 0.000000e+00 : f32
    %33 = vector.broadcast %cst_14 : f32 to vector<2x16xf32>
    %34 = arith.maximumf %32, %33 : vector<2x16xf32>
    %35 = vector.broadcast %5 : vector<1x16xf32> to vector<2x16xf32>
    %36 = arith.mulf %34, %35 : vector<2x16xf32>
    %cst_15 = arith.constant dense<0.000000e+00> : vector<2xf32>
    %37 = vector.multi_reduction <add>, %36, %cst_15 [1] : vector<2x16xf32> to vector<2xf32>
    %38 = vector.shape_cast %37 : vector<2xf32> to vector<2x1xf32>
    %39 = vector.broadcast %6 : vector<1x1xf32> to vector<2x1xf32>
    %40 = arith.addf %38, %39 : vector<2x1xf32>
    %c0_16 = arith.constant 0 : index
    %c0_17 = arith.constant 0 : index
    %41 = vector.load %arg3[%c0_16, %c0_17] : memref<2x1xf32, #tpu.memory_space<vmem>>, vector<2x1xf32>
    tpu.vector_store %arg3[%c0_16, %c0_17], %40 {strides = array<i32>} : memref<2x1xf32, #tpu.memory_space<vmem>>, vector<2x1xf32>,
    return
  }
}

</mosaic_0001>

<llo_original>
// kernel: tpu_custom_call.1
$region0: #{tpu_custom_call.1}
  #allocation0 [shape = 'u32[]', space=smem, size = 0x4, offset = 0x4, fixed_abs, tag = 'smem constant byte address 0x4 - core index']
  #allocation1 [shape = 'u32[144,128]{1,0:T(1,128)}', space=vmem, size = 0x12000, scoped, tag = 'internal scratch']
  %s0 = inlined_call_operand.vmem [shape: f32[2,16], index: 0, kind: input, shape index: {}]
  %s1 = inlined_call_operand.vmem [shape: f32[96,512], index: 1, kind: input, shape index: {}]
  %s2 = inlined_call_operand.vmem [shape: f32[320,64], index: 2, kind: input, shape index: {}]
  %s3 = inlined_call_operand.vmem [shape: f32[2,1], index: 3, kind: output, shape index: {}]
  %s4 = sld [smem:[#allocation0]]
  $region22: #{tpu_custom_call.1} parent=0
    _
  %s6 = ssub.s32 1, %s4
  %s7 = scalar_select 0, %s6, %s4
  // Predicated region
  $region2: #{tpu_custom_call.1} parent=0 // pred_check
    _
  $region3: #{tpu_custom_call.1} parent=0 // pred_check_branch
    %9 = sbr.rel (0) target = $region5
  $region4: #{tpu_custom_call.1} parent=0 // pred_region
    _
  $region5: #{tpu_custom_call.1} parent=0 // pred_fallthru
    _
  // Predicated region
  $region6: #{tpu_custom_call.1} parent=0 // pred_check
    _
  $region7: #{tpu_custom_call.1} parent=0 // pred_check_branch
    %11 = sbr.rel (0) target = $region9
  $region8: #{tpu_custom_call.1} parent=0 // pred_region
    _
  $region9: #{tpu_custom_call.1} parent=0 // pred_fallthru
    _
  // Predicated region
  $region10: #{tpu_custom_call.1} parent=0 // pred_check
    _
  $region11: #{tpu_custom_call.1} parent=0 // pred_check_branch
    %13 = sbr.rel (0) target = $region13
  $region12: #{tpu_custom_call.1} parent=0 // pred_region
    _
  $region13: #{tpu_custom_call.1} parent=0 // pred_fallthru
    _
  %v14 = vld [vmem:[%s1 + $0x160] sm:$0xff]
  %v15 = vld [vmem:[%s1 + $0x168] sm:$0xff]
  %v16 = vld [vmem:[%s1 + $0x170] sm:$0xff]
  %v17 = vld [vmem:[%s1 + $0x178] sm:$0xff]
  %v18 = vld [vmem:[%s0] sm:$0x3]
  %v19 = vld [vmem:[%s1 + $0x120] sm:$0xff]
  %v20 = vld [vmem:[%s1 + $0x140] sm:$0xff]
  %v21 = vlaneseq
  %v22 = vshrl.u32 %v21, 7
  %v23 = vsub.s32 0, %v22
  %v24 = vrot.slane %v14, %v23
  %vm25 = vcmask 130048
  %v27 = vsel %vm25, %v18, 0
  %29 = vmatprep.subr.mxu0 0.0
  %30 = vmatpush1.msra.mxu0 %v19
  %31 = vmatprep.subr.mxu0 0.0
  %32 = vmatpush1.msra.mxu0 %v20
  %33 = vmatprep.subr.mxu0 0.0
  %34 = vmatpush1.msra.mxu0 0.0
  %35 = vmatprep.subr.mxu0 0.0
  %36 = vmatpush1.msra.mxu0 0.0
  %37 = vmatprep.subr.mxu0 0.0
  %38 = vmatpush1.msra.mxu0 0.0
  %39 = vmatprep.subr.mxu0 0.0
  %40 = vmatpush1.msra.mxu0 0.0
  %41 = vmatprep.subr.mxu0 0.0
  %42 = vmatpush1.msra.mxu0 0.0
  %43 = vmatprep.subr.mxu0 0.0
  %44 = vmatpush1.msra.mxu0 0.0
  %45 = vmatprep.subr.mxu0 0.0
  %46 = vmatpush1.msra.mxu0 0.0
  %47 = vmatprep.subr.mxu0 0.0
  %48 = vmatpush1.msra.mxu0 0.0
  %49 = vmatprep.subr.mxu0 0.0
  %50 = vmatpush1.msra.mxu0 0.0
  %51 = vmatprep.subr.mxu0 0.0
  %52 = vmatpush1.msra.mxu0 0.0
  %53 = vmatprep.subr.mxu0 0.0
  %54 = vmatpush1.msra.mxu0 0.0
  %55 = vmatprep.subr.mxu0 0.0
  %56 = vmatpush1.msra.mxu0 0.0
  %57 = vmatprep.subr.mxu0 0.0
  %58 = vmatpush1.msra.mxu0 0.0
  %59 = vmatprep.subr.mxu0 0.0
  %60 = vmatpush1.msra.mxu0 0.0
  %61 = vmatprep.subr.mxu0 0.0
  %62 = vmatpush1.msra.mxu0 0.0
  %63 = vmatprep.subr.mxu0 0.0
  %64 = vmatpush1.msra.mxu0 0.0
  %65 = vmatprep.subr.mxu0 0.0
  %66 = vmatpush1.msra.mxu0 0.0
  %67 = vmatprep.subr.mxu0 0.0
  %68 = vmatpush1.msra.mxu0 0.0
  %69 = vmatprep.subr.mxu0 0.0
  %70 = vmatpush1.msra.mxu0 0.0
  %71 = vmatprep.subr.mxu0 0.0
  %72 = vmatpush1.msra.mxu0 0.0
  %73 = vmatprep.subr.mxu0 0.0
  %74 = vmatpush1.msra.mxu0 0.0
  %75 = vmatprep.subr.mxu0 0.0
  %76 = vmatpush1.msra.mxu0 0.0
  %77 = vmatprep.subr.mxu0 0.0
  %78 = vmatpush1.msra.mxu0 0.0
  %79 = vmatprep.subr.mxu0 0.0
  %80 = vmatpush1.msra.mxu0 0.0
  %81 = vmatprep.subr.mxu0 0.0
  %82 = vmatpush1.msra.mxu0 0.0
  %83 = vmatprep.subr.mxu0 0.0
  %84 = vmatpush1.msra.mxu0 0.0
  %85 = vmatprep.subr.mxu0 0.0
  %86 = vmatpush1.msra.mxu0 0.0
  %87 = vmatprep.subr.mxu0 0.0
  %88 = vmatpush1.msra.mxu0 0.0
  %89 = vmatprep.subr.mxu0 0.0
  %90 = vmatpush1.msra.mxu0 0.0
  %91 = vmatprep.subr.mxu0 0.0
  %92 = vmatpush1.msra.mxu0 0.0
  %93 = vmatprep.mubr.f32.mxu0 0.0
  %94 = vmatmul.mubr.f32.gmra.mrb[0].mxu0 %v27
  %v95 = vpop.f32.mrb[0].mxu0
  %v96 = vadd.f32 %v24, %v95
  %v97 = vpop.f32.mrb[0].mxu0
  %98 = vdwg.mxu0
  %v99 = vmax.f32 %v96, 0.0
  %v100 = vld [vmem:[%s1] sm:$0xff]
  %v101 = vld [vmem:[%s1 + $0x8] sm:$0xff]
  %v102 = vld [vmem:[%s1 + $0x10] sm:$0xff]
  %v103 = vld [vmem:[%s1 + $0x18] sm:$0xff]
  %v104 = vld [vmem:[%s1 + $0x20] sm:$0xff]
  %v105 = vld [vmem:[%s1 + $0x28] sm:$0xff]
  %v106 = vld [vmem:[%s1 + $0x30] sm:$0xff]
  %v107 = vld [vmem:[%s1 + $0x38] sm:$0xff]
  %v108 = vld [vmem:[%s1 + $0x40] sm:$0xff]
  %v109 = vld [vmem:[%s1 + $0x48] sm:$0xff]
  %v110 = vld [vmem:[%s1 + $0x50] sm:$0xff]
  %v111 = vld [vmem:[%s1 + $0x58] sm:$0xff]
  %v112 = vld [vmem:[%s1 + $0x60] sm:$0xff]
  %v113 = vld [vmem:[%s1 + $0x68] sm:$0xff]
  %v114 = vld [vmem:[%s1 + $0x70] sm:$0xff]
  %v115 = vld [vmem:[%s1 + $0x78] sm:$0xff]
  %v116 = vld [vmem:[%s1 + $0x80] sm:$0xff]
  %v117 = vld [vmem:[%s1 + $0x88] sm:$0xff]
  %v118 = vld [vmem:[%s1 + $0x90] sm:$0xff]
  %v119 = vld [vmem:[%s1 + $0x98] sm:$0xff]
  %v120 = vld [vmem:[%s1 + $0xa0] sm:$0xff]
  %v121 = vld [vmem:[%s1 + $0xa8] sm:$0xff]
  %v122 = vld [vmem:[%s1 + $0xb0] sm:$0xff]
  %v123 = vld [vmem:[%s1 + $0xb8] sm:$0xff]
  %v124 = vld [vmem:[%s1 + $0xc0] sm:$0xff]
  %v125 = vld [vmem:[%s1 + $0xc8] sm:$0xff]
  %v126 = vld [vmem:[%s1 + $0xd0] sm:$0xff]
  %v127 = vld [vmem:[%s1 + $0xd8] sm:$0xff]
  %v128 = vld [vmem:[%s1 + $0xe0] sm:$0xff]
  %v129 = vld [vmem:[%s1 + $0xe8] sm:$0xff]
  %v130 = vld [vmem:[%s1 + $0xf0] sm:$0xff]
  %v131 = vld [vmem:[%s1 + $0xf8] sm:$0xff]
  %v132 = vld [vmem:[%s1 + $0x100] sm:$0xff]
  %v133 = vld [vmem:[%s1 + $0x108] sm:$0xff]
  %v134 = vld [vmem:[%s1 + $0x110] sm:$0xff]
  %v135 = vld [vmem:[%s1 + $0x118] sm:$0xff]
  %v136 = vlaneseq
  %v137 = vshrl.u32 %v136, 7
  %v138 = vsub.s32 1, %v137
  %v139 = vrot.slane %v14, %v138
  %v140 = vlaneseq
  %v141 = vshrl.u32 %v140, 7
  %v142 = vsub.s32 1, %v141
  %v143 = vrot.slane %v15, %v142
  %v144 = vlaneseq
  %v145 = vshrl.u32 %v144, 7
  %v146 = vsub.s32 1, %v145
  %v147 = vrot.slane %v16, %v146
  %v148 = vlaneseq
  %v149 = vshrl.u32 %v148, 7
  %v150 = vsub.s32 1, %v149
  %v151 = vrot.slane %v17, %v150
  %vm152 = vcmask 588800
  %v154 = vsel %vm152, %v99, 0
  %156 = vmatprep.subr.mxu0 %v101
  %157 = vmatpush1.msra.mxu0 %v100
  %158 = vmatprep.subr.mxu0 %v105
  %159 = vmatpush1.msra.mxu0 %v104
  %160 = vmatprep.subr.mxu0 %v109
  %161 = vmatpush1.msra.mxu0 %v108
  %162 = vmatprep.subr.mxu0 %v113
  %163 = vmatpush1.msra.mxu0 %v112
  %164 = vmatprep.subr.mxu0 %v117
  %165 = vmatpush1.msra.mxu0 %v116
  %166 = vmatprep.subr.mxu0 %v121
  %167 = vmatpush1.msra.mxu0 %v120
  %168 = vmatprep.subr.mxu0 %v125
  %169 = vmatpush1.msra.mxu0 %v124
  %170 = vmatprep.subr.mxu0 %v129
  %171 = vmatpush1.msra.mxu0 %v128
  %172 = vmatprep.subr.mxu0 %v133
  %173 = vmatpush1.msra.mxu0 %v132
  %174 = vmatprep.subr.mxu0 0.0
  %175 = vmatpush1.msra.mxu0 0.0
  %176 = vmatprep.subr.mxu0 0.0
  %177 = vmatpush1.msra.mxu0 0.0
  %178 = vmatprep.subr.mxu0 0.0
  %179 = vmatpush1.msra.mxu0 0.0
  %180 = vmatprep.subr.mxu0 0.0
  %181 = vmatpush1.msra.mxu0 0.0
  %182 = vmatprep.subr.mxu0 0.0
  %183 = vmatpush1.msra.mxu0 0.0
  %184 = vmatprep.subr.mxu0 0.0
  %185 = vmatpush1.msra.mxu0 0.0
  %186 = vmatprep.subr.mxu0 0.0
  %187 = vmatpush1.msra.mxu0 0.0
  %188 = vmatprep.subr.mxu0 0.0
  %189 = vmatpush1.msra.mxu0 0.0
  %190 = vmatprep.subr.mxu0 0.0
  %191 = vmatpush1.msra.mxu0 0.0
  %192 = vmatprep.subr.mxu0 0.0
  %193 = vmatpush1.msra.mxu0 0.0
  %194 = vmatprep.subr.mxu0 0.0
  %195 = vmatpush1.msra.mxu0 0.0
  %196 = vmatprep.subr.mxu0 0.0
  %197 = vmatpush1.msra.mxu0 0.0
  %198 = vmatprep.subr.mxu0 0.0
  %199 = vmatpush1.msra.mxu0 0.0
  %200 = vmatprep.subr.mxu0 0.0
  %201 = vmatpush1.msra.mxu0 0.0
  %202 = vmatprep.subr.mxu0 0.0
  %203 = vmatpush1.msra.mxu0 0.0
  %204 = vmatprep.subr.mxu0 0.0
  %205 = vmatpush1.msra.mxu0 0.0
  %206 = vmatprep.subr.mxu0 0.0
  %207 = vmatpush1.msra.mxu0 0.0
  %208 = vmatprep.subr.mxu0 0.0
  %209 = vmatpush1.msra.mxu0 0.0
  %210 = vmatprep.subr.mxu0 0.0
  %211 = vmatpush1.msra.mxu0 0.0
  %212 = vmatprep.subr.mxu0 0.0
  %213 = vmatpush1.msra.mxu0 0.0
  %214 = vmatprep.subr.mxu0 0.0
  %215 = vmatpush1.msra.mxu0 0.0
  %216 = vmatprep.subr.mxu0 0.0
  %217 = vmatpush1.msra.mxu0 0.0
  %218 = vmatprep.subr.mxu0 0.0
  %219 = vmatpush1.msra.mxu0 0.0
  %220 = vmatprep.mubr.f32.mxu0 0.0
  %221 = vmatmul.mubr.f32.gmra.mrb[0].mxu0 %v154
  %v222 = vpop.f32.mrb[0].mxu0
  %v223 = vadd.f32 %v139, %v222
  %v224 = vpop.f32.mrb[0].mxu0
  %v225 = vadd.f32 %v143, %v224
  %226 = vdwg.mxu0
  %227 = vmatprep.subr.mxu0 %v103
  %228 = vmatpush1.msra.mxu0 %v102
  %229 = vmatprep.subr.mxu0 %v107
  %230 = vmatpush1.msra.mxu0 %v106
  %231 = vmatprep.subr.mxu0 %v111
  %232 = vmatpush1.msra.mxu0 %v110
  %233 = vmatprep.subr.mxu0 %v115
  %234 = vmatpush1.msra.mxu0 %v114
  %235 = vmatprep.subr.mxu0 %v119
  %236 = vmatpush1.msra.mxu0 %v118
  %237 = vmatprep.subr.mxu0 %v123
  %238 = vmatpush1.msra.mxu0 %v122
  %239 = vmatprep.subr.mxu0 %v127
  %240 = vmatpush1.msra.mxu0 %v126
  %241 = vmatprep.subr.mxu0 %v131
  %242 = vmatpush1.msra.mxu0 %v130
  %243 = vmatprep.subr.mxu0 %v135
  %244 = vmatpush1.msra.mxu0 %v134
  %245 = vmatprep.subr.mxu0 0.0
  %246 = vmatpush1.msra.mxu0 0.0
  %247 = vmatprep.subr.mxu0 0.0
  %248 = vmatpush1.msra.mxu0 0.0
  %249 = vmatprep.subr.mxu0 0.0
  %250 = vmatpush1.msra.mxu0 0.0
  %251 = vmatprep.subr.mxu0 0.0
  %252 = vmatpush1.msra.mxu0 0.0
  %253 = vmatprep.subr.mxu0 0.0
  %254 = vmatpush1.msra.mxu0 0.0
  %255 = vmatprep.subr.mxu0 0.0
  %256 = vmatpush1.msra.mxu0 0.0
  %257 = vmatprep.subr.mxu0 0.0
  %258 = vmatpush1.msra.mxu0 0.0
  %259 = vmatprep.subr.mxu0 0.0
  %260 = vmatpush1.msra.mxu0 0.0
  %261 = vmatprep.subr.mxu0 0.0
  %262 = vmatpush1.msra.mxu0 0.0
  %263 = vmatprep.subr.mxu0 0.0
  %264 = vmatpush1.msra.mxu0 0.0
  %265 = vmatprep.subr.mxu0 0.0
  %266 = vmatpush1.msra.mxu0 0.0
  %267 = vmatprep.subr.mxu0 0.0
  %268 = vmatpush1.msra.mxu0 0.0
  %269 = vmatprep.subr.mxu0 0.0
  %270 = vmatpush1.msra.mxu0 0.0
  %271 = vmatprep.subr.mxu0 0.0
  %272 = vmatpush1.msra.mxu0 0.0
  %273 = vmatprep.subr.mxu0 0.0
  %274 = vmatpush1.msra.mxu0 0.0
  %275 = vmatprep.subr.mxu0 0.0
  %276 = vmatpush1.msra.mxu0 0.0
  %277 = vmatprep.subr.mxu0 0.0
  %278 = vmatpush1.msra.mxu0 0.0
  %279 = vmatprep.subr.mxu0 0.0
  %280 = vmatpush1.msra.mxu0 0.0
  %281 = vmatprep.subr.mxu0 0.0
  %282 = vmatpush1.msra.mxu0 0.0
  %283 = vmatprep.subr.mxu0 0.0
  %284 = vmatpush1.msra.mxu0 0.0
  %285 = vmatprep.subr.mxu0 0.0
  %286 = vmatpush1.msra.mxu0 0.0
  %287 = vmatprep.subr.mxu0 0.0
  %288 = vmatpush1.msra.mxu0 0.0
  %289 = vmatprep.subr.mxu0 0.0
  %290 = vmatpush1.msra.mxu0 0.0
  %291 = vmatprep.mubr.f32.mxu0 0.0
  %292 = vmatmul.mubr.f32.gmra.mrb[0].mxu0 %v154
  %v293 = vpop.f32.mrb[0].mxu0
  %v294 = vadd.f32 %v147, %v293
  %v295 = vpop.f32.mrb[0].mxu0
  %v296 = vadd.f32 %v151, %v295
  %297 = vdwg.mxu0
  %v298 = vmax.f32 %v223, 0.0
  %v299 = vmax.f32 %v225, 0.0
  %v300 = vmax.f32 %v294, 0.0
  %v301 = vmax.f32 %v296, 0.0
  %v302 = vmax.f32 %v298, %v300
  %v303 = vmax.f32 %v299, %v301
  %v304 = vld [vmem:[%s2] sm:$0xff]
  %v305 = vld [vmem:[%s2 + $0x8] sm:$0xff]
  %v306 = vld [vmem:[%s2 + $0x10] sm:$0xff]
  %v307 = vld [vmem:[%s2 + $0x18] sm:$0xff]
  %v308 = vld [vmem:[%s2 + $0x20] sm:$0xff]
  %v309 = vld [vmem:[%s2 + $0x28] sm:$0xff]
  %v310 = vld [vmem:[%s2 + $0x30] sm:$0xff]
  %v311 = vld [vmem:[%s2 + $0x38] sm:$0xff]
  %v312 = vld [vmem:[%s2 + $0x40] sm:$0xff]
  %v313 = vld [vmem:[%s2 + $0x48] sm:$0xff]
  %v314 = vld [vmem:[%s2 + $0x50] sm:$0xff]
  %v315 = vld [vmem:[%s2 + $0x58] sm:$0xff]
  %v316 = vld [vmem:[%s2 + $0x60] sm:$0xff]
  %v317 = vld [vmem:[%s2 + $0x68] sm:$0xff]
  %v318 = vld [vmem:[%s2 + $0x70] sm:$0xff]
  %v319 = vld [vmem:[%s2 + $0x78] sm:$0xff]
  %v320 = vld [vmem:[%s2 + $0x80] sm:$0xff]
  %v321 = vld [vmem:[%s2 + $0x88] sm:$0xff]
  %v322 = vld [vmem:[%s2 + $0x90] sm:$0xff]
  %v323 = vld [vmem:[%s2 + $0x98] sm:$0xff]
  %v324 = vld [vmem:[%s2 + $0xa0] sm:$0xff]
  %v325 = vld [vmem:[%s2 + $0xa8] sm:$0xff]
  %v326 = vld [vmem:[%s2 + $0xb0] sm:$0xff]
  %v327 = vld [vmem:[%s2 + $0xb8] sm:$0xff]
  %v328 = vld [vmem:[%s2 + $0xc0] sm:$0xff]
  %v329 = vld [vmem:[%s2 + $0xc8] sm:$0xff]
  %v330 = vld [vmem:[%s2 + $0xd0] sm:$0xff]
  %v331 = vld [vmem:[%s2 + $0xd8] sm:$0xff]
  %v332 = vld [vmem:[%s2 + $0xe0] sm:$0xff]
  %v333 = vld [vmem:[%s2 + $0xe8] sm:$0xff]
  %v334 = vld [vmem:[%s2 + $0xf0] sm:$0xff]
  %v335 = vld [vmem:[%s2 + $0xf8] sm:$0xff]
  %v336 = vlaneseq
  %v337 = vshrl.u32 %v336, 7
  %v338 = vsub.s32 2, %v337
  %v339 = vrot.slane %v14, %v338
  %340 = vmatprep.subr.mxu0 0.0
  %341 = vmatpush1.msra.mxu0 %v304
  %342 = vmatprep.subr.mxu0 0.0
  %343 = vmatpush1.msra.mxu0 %v305
  %344 = vmatprep.subr.mxu0 0.0
  %345 = vmatpush1.msra.mxu0 %v306
  %346 = vmatprep.subr.mxu0 0.0
  %347 = vmatpush1.msra.mxu0 %v307
  %348 = vmatprep.subr.mxu0 0.0
  %349 = vmatpush1.msra.mxu0 %v308
  %350 = vmatprep.subr.mxu0 0.0
  %351 = vmatpush1.msra.mxu0 %v309
  %352 = vmatprep.subr.mxu0 0.0
  %353 = vmatpush1.msra.mxu0 %v310
  %354 = vmatprep.subr.mxu0 0.0
  %355 = vmatpush1.msra.mxu0 %v311
  %356 = vmatprep.subr.mxu0 0.0
  %357 = vmatpush1.msra.mxu0 %v312
  %358 = vmatprep.subr.mxu0 0.0
  %359 = vmatpush1.msra.mxu0 %v313
  %360 = vmatprep.subr.mxu0 0.0
  %361 = vmatpush1.msra.mxu0 %v314
  %362 = vmatprep.subr.mxu0 0.0
  %363 = vmatpush1.msra.mxu0 %v315
  %364 = vmatprep.subr.mxu0 0.0
  %365 = vmatpush1.msra.mxu0 %v316
  %366 = vmatprep.subr.mxu0 0.0
  %367 = vmatpush1.msra.mxu0 %v317
  %368 = vmatprep.subr.mxu0 0.0
  %369 = vmatpush1.msra.mxu0 %v318
  %370 = vmatprep.subr.mxu0 0.0
  %371 = vmatpush1.msra.mxu0 %v319
  %372 = vmatprep.subr.mxu0 0.0
  %373 = vmatpush1.msra.mxu0 %v320
  %374 = vmatprep.subr.mxu0 0.0
  %375 = vmatpush1.msra.mxu0 %v321
  %376 = vmatprep.subr.mxu0 0.0
  %377 = vmatpush1.msra.mxu0 %v322
  %378 = vmatprep.subr.mxu0 0.0
  %379 = vmatpush1.msra.mxu0 %v323
  %380 = vmatprep.subr.mxu0 0.0
  %381 = vmatpush1.msra.mxu0 %v324
  %382 = vmatprep.subr.mxu0 0.0
  %383 = vmatpush1.msra.mxu0 %v325
  %384 = vmatprep.subr.mxu0 0.0
  %385 = vmatpush1.msra.mxu0 %v326
  %386 = vmatprep.subr.mxu0 0.0
  %387 = vmatpush1.msra.mxu0 %v327
  %388 = vmatprep.subr.mxu0 0.0
  %389 = vmatpush1.msra.mxu0 %v328
  %390 = vmatprep.subr.mxu0 0.0
  %391 = vmatpush1.msra.mxu0 %v329
  %392 = vmatprep.subr.mxu0 0.0
  %393 = vmatpush1.msra.mxu0 %v330
  %394 = vmatprep.subr.mxu0 0.0
  %395 = vmatpush1.msra.mxu0 %v331
  %396 = vmatprep.subr.mxu0 0.0
  %397 = vmatpush1.msra.mxu0 %v332
  %398 = vmatprep.subr.mxu0 0.0
  %399 = vmatpush1.msra.mxu0 %v333
  %400 = vmatprep.subr.mxu0 0.0
  %401 = vmatpush1.msra.mxu0 %v334
  %402 = vmatprep.subr.mxu0 0.0
  %403 = vmatpush1.msra.mxu0 %v335
  %404 = vmatprep.mubr.f32.mxu0 %v303
  %405 = vmatmul.mubr.f32.gmra.mrb[0].mxu0 %v302
  %v406 = vpop.f32.mrb[0].mxu0
  %v407 = vadd.f32 %v339, %v406
  %v408 = vpop.f32.mrb[0].mxu0
  %409 = vdwg.mxu0
  %v410 = vmax.f32 %v407, 0.0
  %v411 = vld [vmem:[%s2 + $0x100] sm:$0xff]
  %v412 = vld [vmem:[%s2 + $0x108] sm:$0xff]
  %v413 = vld [vmem:[%s2 + $0x110] sm:$0xff]
  %v414 = vld [vmem:[%s2 + $0x118] sm:$0xff]
  %v415 = vld [vmem:[%s2 + $0x120] sm:$0xff]
  %v416 = vld [vmem:[%s2 + $0x128] sm:$0xff]
  %v417 = vld [vmem:[%s2 + $0x130] sm:$0xff]
  %v418 = vld [vmem:[%s2 + $0x138] sm:$0xff]
  %v419 = vlaneseq
  %v420 = vshrl.u32 %v419, 7
  %v421 = vsub.s32 3, %v420
  %v422 = vrot.slane %v14, %v421
  %vm423 = vcmask 523264
  %v425 = vsel %vm423, %v410, 0
  %427 = vmatprep.subr.mxu0 0.0
  %428 = vmatpush1.msra.mxu0 %v411
  %429 = vmatprep.subr.mxu0 0.0
  %430 = vmatpush1.msra.mxu0 %v412
  %431 = vmatprep.subr.mxu0 0.0
  %432 = vmatpush1.msra.mxu0 %v413
  %433 = vmatprep.subr.mxu0 0.0
  %434 = vmatpush1.msra.mxu0 %v414
  %435 = vmatprep.subr.mxu0 0.0
  %436 = vmatpush1.msra.mxu0 %v415
  %437 = vmatprep.subr.mxu0 0.0
  %438 = vmatpush1.msra.mxu0 %v416
  %439 = vmatprep.subr.mxu0 0.0
  %440 = vmatpush1.msra.mxu0 %v417
  %441 = vmatprep.subr.mxu0 0.0
  %442 = vmatpush1.msra.mxu0 %v418
  %443 = vmatprep.subr.mxu0 0.0
  %444 = vmatpush1.msra.mxu0 0.0
  %445 = vmatprep.subr.mxu0 0.0
  %446 = vmatpush1.msra.mxu0 0.0
  %447 = vmatprep.subr.mxu0 0.0
  %448 = vmatpush1.msra.mxu0 0.0
  %449 = vmatprep.subr.mxu0 0.0
  %450 = vmatpush1.msra.mxu0 0.0
  %451 = vmatprep.subr.mxu0 0.0
  %452 = vmatpush1.msra.mxu0 0.0
  %453 = vmatprep.subr.mxu0 0.0
  %454 = vmatpush1.msra.mxu0 0.0
  %455 = vmatprep.subr.mxu0 0.0
  %456 = vmatpush1.msra.mxu0 0.0
  %457 = vmatprep.subr.mxu0 0.0
  %458 = vmatpush1.msra.mxu0 0.0
  %459 = vmatprep.subr.mxu0 0.0
  %460 = vmatpush1.msra.mxu0 0.0
  %461 = vmatprep.subr.mxu0 0.0
  %462 = vmatpush1.msra.mxu0 0.0
  %463 = vmatprep.subr.mxu0 0.0
  %464 = vmatpush1.msra.mxu0 0.0
  %465 = vmatprep.subr.mxu0 0.0
  %466 = vmatpush1.msra.mxu0 0.0
  %467 = vmatprep.subr.mxu0 0.0
  %468 = vmatpush1.msra.mxu0 0.0
  %469 = vmatprep.subr.mxu0 0.0
  %470 = vmatpush1.msra.mxu0 0.0
  %471 = vmatprep.subr.mxu0 0.0
  %472 = vmatpush1.msra.mxu0 0.0
  %473 = vmatprep.subr.mxu0 0.0
  %474 = vmatpush1.msra.mxu0 0.0
  %475 = vmatprep.subr.mxu0 0.0
  %476 = vmatpush1.msra.mxu0 0.0
  %477 = vmatprep.subr.mxu0 0.0
  %478 = vmatpush1.msra.mxu0 0.0
  %479 = vmatprep.subr.mxu0 0.0
  %480 = vmatpush1.msra.mxu0 0.0
  %481 = vmatprep.subr.mxu0 0.0
  %482 = vmatpush1.msra.mxu0 0.0
  %483 = vmatprep.subr.mxu0 0.0
  %484 = vmatpush1.msra.mxu0 0.0
  %485 = vmatprep.subr.mxu0 0.0
  %486 = vmatpush1.msra.mxu0 0.0
  %487 = vmatprep.subr.mxu0 0.0
  %488 = vmatpush1.msra.mxu0 0.0
  %489 = vmatprep.subr.mxu0 0.0
  %490 = vmatpush1.msra.mxu0 0.0
  %491 = vmatprep.mubr.f32.mxu0 0.0
  %492 = vmatmul.mubr.f32.gmra.mrb[0].mxu0 %v425
  %v493 = vpop.f32.mrb[0].mxu0
  %v494 = vadd.f32 %v422, %v493
  %v495 = vpop.f32.mrb[0].mxu0
  %496 = vdwg.mxu0
  %v497 = vmax.f32 %v494, 0.0
  %v498 = vlaneseq
  %v499 = vshrl.u32 %v498, 7
  %v500 = vsub.s32 4, %v499
  %v501 = vrot.slane %v14, %v500
  %v502 = vmul.f32 %v497, %v501
  %vm503 = vcmask 123904
  %v504 = vsel %vm503, %v502, 0.0
  %505 = vadd.xlane.f32.xlu0 %v504
  %v506 = vpop.xlane.xlu0 %505
  %v507 = vlaneseq
  %v508 = vshrl.u32 %v507, 7
  %v509 = vsub.s32 5, %v508
  %v510 = vrot.slane %v14, %v509
  %v511 = vadd.f32 %v506, %v510
  %vm512 = vcmask 1024
  %513 = vst.msk [vmem:[%s3] sm:$0x3] %vm512, %v511
  // Predicated region
  $region14: #{tpu_custom_call.1} parent=0 // pred_check
    _
  $region15: #{tpu_custom_call.1} parent=0 // pred_check_branch
    %515 = sbr.rel (0) target = $region17
  $region16: #{tpu_custom_call.1} parent=0 // pred_region
    _
  $region17: #{tpu_custom_call.1} parent=0 // pred_fallthru
    _
  // Predicated region
  $region18: #{tpu_custom_call.1} parent=0 // pred_check
    _
  $region19: #{tpu_custom_call.1} parent=0 // pred_check_branch
    %517 = sbr.rel (0) target = $region21
  $region20: #{tpu_custom_call.1} parent=0 // pred_region
    _
  $region21: #{tpu_custom_call.1} parent=0 // pred_fallthru
    _

</llo_original>
